<compile_context>
chip_gen: v6e
topology: v6e:2x2x1
jax: 0.10.0
libtpu: 0.0.40
codegen_flags: <defaults>
</compile_context>

<pallas_src>
import functools
import math

import jax
import jax.numpy as jnp
from jax.experimental import pallas as pl
from jax.experimental.pallas import tpu as pltpu


def _one_hot_attention(T, S, di):
    """(T, S) one-hot attention matrix matching the PyTorch construction."""
    if T != 1:
        rows = jnp.arange(T, dtype=jnp.int32)[:, None]
        cols = jnp.arange(S, dtype=jnp.int32)[None, :]
        # for i in range(T): attn[:, i, i-1] = 1 if S == i else attn[:, i, i] = 1
        target = jnp.where(rows == S, rows - 1, rows)
        return (cols == target).astype(jnp.float32)
    # T == 1 path.
    # TODO(synk): self.mask masked_fill_(-inf) branch not implemented (mask is None in
    # __init__ and the subsequent one-hot write overwrites those positions anyway).
    if S == di and S > 0:
        col = di - 1
    elif S > di:
        col = di
    else:
        return jnp.zeros((1, S), jnp.float32)
    return (jnp.arange(S, dtype=jnp.int32)[None, :] == col).astype(jnp.float32)


def _hard_attention_kernel(out_ref, ctx_ref, w_ref, b_ref, y_ref, *,
                           T, S, ctx_row_off, t1_has_mix):
    # out_ref : (bblk*T, H) flattened decoder output (f32)
    # ctx_ref : (bblk, ctx_blk_rows, H) trimmed encoder context (f32)
    # w_ref   : (2H, H) == linear_out.weight.T, bf16, resident
    # b_ref   : (1, H) f32, resident
    # y_ref   : (bblk*T, H) f32
    M, H = out_ref.shape
    bblk = M // T

    w1 = w_ref[:H, :]            # static slices of the single resident weight ref
    w2 = w_ref[H:, :]

    out2d = out_ref[...].astype(jnp.bfloat16)
    # Linear(2H->H) == mix @ W1 + out @ W2 + b : two MXU dots sharing one f32 accumulator
    # (accumulate form so v7x can use MRB in-place accumulation).
    acc = jnp.dot(out2d, w2, preferred_element_type=jnp.float32)

    if T != 1:
        ctx = ctx_ref[...]                         # (bblk, ctx_blk_rows, H)
        if T <= S:
            # mix = one_hot_attn @ ctx == identity gather of the first T context rows.
            mix = ctx[:, :T, :]
        else:
            parts = [ctx[:, :S, :], ctx[:, S - 1:S, :]]   # row i==S picks column S-1
            if T > S + 1:
                # TODO(synk): rows i > S would raise IndexError in PyTorch; emit zero mix.
                parts.append(jnp.zeros((bblk, T - S - 1, H), ctx.dtype))
            mix = jnp.concatenate(parts, axis=1)
        mix2d = mix.reshape(M, H).astype(jnp.bfloat16)
        acc = acc + jnp.dot(mix2d, w1, preferred_element_type=jnp.float32)
    elif t1_has_mix:
        # T == 1: mix is the single statically-known context row (already the only rows
        # DMA'd into this block); no MXU pass over attention needed.
        mix2d = ctx_ref[...][:, ctx_row_off, :].astype(jnp.bfloat16)   # (bblk, H)
        acc = acc + jnp.dot(mix2d, w1, preferred_element_type=jnp.float32)
    # else: T == 1 and S < di -> mix is all zeros, skip its dot entirely.
    # TODO(synk): T == 1 masked_fill_(-inf) mask branch not implemented (mask is None).

    y_ref[...] = jnp.tanh(acc + b_ref[...]).astype(y_ref.dtype)


def _vmem_capacity_bytes():
    """Physical VMEM capacity (v5e/v6e: 128 MiB, v7x: 64 MiB); conservative fallback."""
    try:
        info = pltpu.get_tpu_info()
        cap = getattr(info, "vmem_capacity_bytes", None)
        if cap:
            return int(cap)
    except Exception:
        pass
    return 64 << 20


def _pick_batch_block(B, T, ctx_rows, H, vmem_cap):
    """Batch block size: largest block fitting ~1/4 of VMEM (double-buffered), with
    bblk*T a multiple of 8 (sublane tiling) and the grid kept >= 2 where possible so
    both v7x TensorCores get work."""
    # f32 activation bytes per batch element (decoder in + y out + trimmed context)
    # plus rough in-kernel temps (mix copy + bf16 operand casts).
    per_batch = 4 * H * (2 * T + ctx_rows) + 6 * H * T
    act_budget = vmem_cap // 4                       # total for double-buffered blocks
    cap = max(1, act_budget // (2 * per_batch))
    g = 8 // math.gcd(T, 8)                          # bblk multiple so bblk*T % 8 == 0
    if B >= 2 * g:
        cap = min(cap, pl.cdiv(B, 2))                # grid >= 2 -> both TCs busy
    bblk = max(g, (min(B, cap) // g) * g)
    return bblk


def hard_attention(output, context, di, w_t, bias):
    """Pallas implementation of HardAttention.forward.

    output : (B, T, H), context : (B, S, H)
    w_t    : (2H, H)  == linear_out.weight.T
    bias   : (H,)
    returns (y, attn) with y : (B, T, H), attn : (B, T, S)
    """
    B, T, H = output.shape
    S = context.shape[1]
    assert w_t.shape == (2 * H, H)

    # ---- static one-hot attention bookkeeping (which context rows are ever read) ----
    if T != 1:
        needed_rows = min(T, S)
        t1_has_mix = False
        ctx_row = 0
    else:
        t1_has_mix = (S >= di) and S > 0
        ctx_row = (di - 1) if (S == di and t1_has_mix) else (di if t1_has_mix else 0)
        needed_rows = 1

    # Trimmed context block: only DMA the rows the attention can read, rounded up to the
    # 8-sublane tile (or the full S when that is smaller).
    ctx_blk_rows = min(S, -(-needed_rows // 8) * 8)
    ctx_blk_rows = max(1, ctx_blk_rows)
    ctx_blk_idx = (ctx_row // ctx_blk_rows) if T == 1 else 0
    ctx_row_off = (ctx_row % ctx_blk_rows) if T == 1 else 0

    vmem_cap = _vmem_capacity_bytes()
    bblk = _pick_batch_block(B, T, ctx_blk_rows, H, vmem_cap)
    grid = (pl.cdiv(B, bblk),)
    B_pad = grid[0] * bblk

    # Pad batch so the cdiv grid needs no in-kernel masking; padded rows sliced off below.
    if B_pad != B:
        output = jnp.concatenate(
            [output, jnp.zeros((B_pad - B, T, H), output.dtype)], axis=0)
        context = jnp.concatenate(
            [context, jnp.zeros((B_pad - B, S, H), context.dtype)], axis=0)

    out2d_in = output.reshape(B_pad * T, H)        # HBM-side collapse (free reshape)
    w_bf16 = w_t.astype(jnp.bfloat16)              # bf16 MXU operands, f32 accumulation
    b2d = bias.reshape(1, H).astype(jnp.float32)

    # VMEM budget: double-buffered activation blocks + in-kernel temps + resident params.
    blk_act = 4 * bblk * H * (2 * T + ctx_blk_rows)
    temps = 6 * bblk * T * H
    params = 2 * (2 * H * H) + 4 * H
    vmem_limit = int(min(vmem_cap - (4 << 20),
                         max(16 << 20, 2 * blk_act + temps + 2 * params + (2 << 20))))

    kernel = functools.partial(_hard_attention_kernel, T=T, S=S,
                               ctx_row_off=ctx_row_off, t1_has_mix=t1_has_mix)

    def run(single_buffer_params):
        pmode = {"pipeline_mode": pl.Buffered(1)} if single_buffer_params else {}
        # TODO(synk): for H < 128 a lane-dense (B, T*H) output slab would avoid masked
        # vst partial stores on v5e; left as-is since production dims are >= 128.
        return pl.pallas_call(
            kernel,
            out_shape=jax.ShapeDtypeStruct((B_pad * T, H), jnp.float32),
            grid=grid,
            in_specs=[
                pl.BlockSpec((bblk * T, H), lambda b: (b, 0)),              # decoder out
                pl.BlockSpec((bblk, ctx_blk_rows, H),
                             lambda b, _i=ctx_blk_idx: (b, _i, 0)),         # trimmed ctx
                pl.BlockSpec((2 * H, H), lambda b: (0, 0), **pmode),        # resident W^T
                pl.BlockSpec((1, H), lambda b: (0, 0), **pmode),            # resident bias
            ],
            out_specs=pl.BlockSpec((bblk * T, H), lambda b: (b, 0)),
            compiler_params=pltpu.CompilerParams(
                dimension_semantics=("parallel",),
                vmem_limit_bytes=vmem_limit),
        )(out2d_in, context, w_bf16, b2d)

    try:
        y2d = run(True)       # resident params single-buffered (no wasted 2nd buffer)
    except Exception:
        # TODO(synk): fall back if this JAX build rejects pl.Buffered(1) single-buffering.
        y2d = run(False)

    y = y2d.reshape(B_pad, T, H)[:B]
    # attn is batch-invariant: build once in plain JAX and broadcast.
    attn = jnp.broadcast_to(_one_hot_attention(T, S, di)[None], (B, T, S))
    return y, attn


def _reference(output, context, di, w_t, bias):
    """Pure-JAX reference mirroring the PyTorch forward."""
    B, T, H = output.shape
    S = context.shape[1]
    attn = jnp.zeros((B, T, S), jnp.float32)
    if T != 1:
        for i in range(T):
            col = i - 1 if S == i else i
            if col < S:
                attn = attn.at[:, i, col].set(1.0)
    else:
        if S == di:
            attn = attn.at[:, :, di - 1].set(1.0)
        elif S > di:
            attn = attn.at[:, :, di].set(1.0)
    mix = jnp.einsum("bts,bsh->bth", attn, context)
    combined = jnp.concatenate([mix, output], axis=-1)
    y = jnp.tanh(combined.reshape(-1, 2 * H) @ w_t + bias).reshape(B, T, H)
    return y, attn


if __name__ == "__main__":
    B, T, S, H = 2, 8, 8, 32   # dim = H = 32
    key = jax.random.PRNGKey(0)
    k1, k2, k3, k4 = jax.random.split(key, 4)

    output = jax.random.normal(k1, (B, T, H), dtype=jnp.float32)
    context = jax.random.normal(k2, (B, S, H), dtype=jnp.float32)
    # Deterministic Linear(2H -> H) parameters (uniform like PyTorch default init).
    bound = 1.0 / jnp.sqrt(2.0 * H)
    w_t = jax.random.uniform(k3, (2 * H, H), jnp.float32, -bound, bound)  # W.T
    bias = jax.random.uniform(k4, (H,), jnp.float32, -bound, bound)
    di = 0

    y, attn = hard_attention(output, context, di, w_t, bias)
    jax.block_until_ready((y, attn))

    y_ref, attn_ref = _reference(output, context, di, w_t, bias)
    # bf16 MXU operands with f32 accumulation -> slightly looser tolerance than pure f32.
    assert jnp.allclose(y, y_ref, atol=3e-2), "output mismatch"
    assert jnp.allclose(attn, attn_ref), "attn mismatch"

    print("KERNEL_OK")
</pallas_src>

<mosaic_0001>
module attributes {stable_mosaic.version = 11 : i64} {
  func.func @_hard_attention_kernel(%arg0: i32, %arg1: memref<8x32xf32, #tpu.memory_space<vmem>>, %arg2: memref<1x8x32xf32, #tpu.memory_space<vmem>>, %arg3: memref<64x32xbf16, #tpu.memory_space<vmem>>, %arg4: memref<1x32xf32, #tpu.memory_space<vmem>>, %arg5: memref<8x32xf32, #tpu.memory_space<vmem>>) attributes {dimension_semantics = [#tpu.dimension_semantics<parallel>], iteration_bounds = array<i64: 2>, scalar_prefetch = 0 : i64, scratch_operands = 0 : i64, tpu.core_type = #tpu.core_type<tc>, window_params = [{transform_indices = @transform_0, window_bounds = array<i64: 8, 32>}, {transform_indices = @transform_1, window_bounds = array<i64: 1, 8, 32>}, {pipeline_mode = #tpu.pipeline_mode<synchronous>, transform_indices = @transform_2, window_bounds = array<i64: 64, 32>}, {pipeline_mode = #tpu.pipeline_mode<synchronous>, transform_indices = @transform_3, window_bounds = array<i64: 1, 32>}, {transform_indices = @transform_4, window_bounds = array<i64: 8, 32>}]} {
    %c0 = arith.constant 0 : index
    %c0_0 = arith.constant 0 : index
    %0 = vector.load %arg3[%c0, %c0_0] : memref<64x32xbf16, #tpu.memory_space<vmem>>, vector<32x32xbf16>
    %c32 = arith.constant 32 : index
    %c0_1 = arith.constant 0 : index
    %1 = vector.load %arg3[%c32, %c0_1] : memref<64x32xbf16, #tpu.memory_space<vmem>>, vector<32x32xbf16>
    %c0_2 = arith.constant 0 : index
    %c0_3 = arith.constant 0 : index
    %2 = vector.load %arg1[%c0_2, %c0_3] : memref<8x32xf32, #tpu.memory_space<vmem>>, vector<8x32xf32>
    %3 = arith.truncf %2 : vector<8x32xf32> to vector<8x32xbf16>
    %cst = arith.constant dense<0.000000e+00> : vector<8x32xf32>
    %4 = tpu.matmul %3, %1, %cst {dimension_numbers = #tpu.dot_dimension_numbers<[1], [0], [0], [1], [0, 0, 1, 1], [], []>} : vector<8x32xbf16>, vector<32x32xbf16>, vector<8x32xf32> -> vector<8x32xf32>
    %c0_4 = arith.constant 0 : index
    %c0_5 = arith.constant 0 : index
    %c0_6 = arith.constant 0 : index
    %5 = vector.load %arg2[%c0_4, %c0_5, %c0_6] : memref<1x8x32xf32, #tpu.memory_space<vmem>>, vector<1x8x32xf32>
    %6 = vector.shape_cast %5 : vector<1x8x32xf32> to vector<8x32xf32>
    %7 = arith.truncf %6 : vector<8x32xf32> to vector<8x32xbf16>
    %cst_7 = arith.constant dense<0.000000e+00> : vector<8x32xf32>
    %8 = tpu.matmul %7, %0, %cst_7 {dimension_numbers = #tpu.dot_dimension_numbers<[1], [0], [0], [1], [0, 0, 1, 1], [], []>} : vector<8x32xbf16>, vector<32x32xbf16>, vector<8x32xf32> -> vector<8x32xf32>
    %9 = arith.addf %4, %8 : vector<8x32xf32>
    %c0_8 = arith.constant 0 : index
    %c0_9 = arith.constant 0 : index
    %10 = vector.load %arg4[%c0_8, %c0_9] : memref<1x32xf32, #tpu.memory_space<vmem>>, vector<1x32xf32>
    %11 = vector.broadcast %10 : vector<1x32xf32> to vector<8x32xf32>
    %12 = arith.addf %9, %11 : vector<8x32xf32>
    %13 = math.tanh %12 : vector<8x32xf32>
    %c0_10 = arith.constant 0 : index
    %c0_11 = arith.constant 0 : index
    %14 = vector.load %arg5[%c0_10, %c0_11] : memref<8x32xf32, #tpu.memory_space<vmem>>, vector<8x32xf32>
    tpu.vector_store %arg5[%c0_10, %c0_11], %13 {strides = array<i32>} : memref<8x32xf32, #tpu.memory_space<vmem>>, vector<8x32xf32>,
    return
  }
  func.func @transform_0(%arg0: i32) -> (i32, i32) {
    %c0_i32 = arith.constant 0 : i32
    %c0_i32_0 = arith.constant 0 : i32
    return %arg0, %c0_i32 : i32, i32
  }
  func.func @transform_1(%arg0: i32) -> (i32, i32, i32) {
    %c0_i32 = arith.constant 0 : i32
    %c0_i32_0 = arith.constant 0 : i32
    %c0_i32_1 = arith.constant 0 : i32
    return %arg0, %c0_i32, %c0_i32_0 : i32, i32, i32
  }
  func.func @transform_2(%arg0: i32) -> (i32, i32) {
    %c0_i32 = arith.constant 0 : i32
    %c0_i32_0 = arith.constant 0 : i32
    %c0_i32_1 = arith.constant 0 : i32
    return %c0_i32, %c0_i32_0 : i32, i32
  }
  func.func @transform_3(%arg0: i32) -> (i32, i32) {
    %c0_i32 = arith.constant 0 : i32
    %c0_i32_0 = arith.constant 0 : i32
    %c0_i32_1 = arith.constant 0 : i32
    return %c0_i32, %c0_i32_0 : i32, i32
  }
  func.func @transform_4(%arg0: i32) -> (i32, i32) {
    %c0_i32 = arith.constant 0 : i32
    %c0_i32_0 = arith.constant 0 : i32
    return %arg0, %c0_i32 : i32, i32
  }
}

module attributes {stable_mosaic.version = 11 : i64} {
  func.func @_hard_attention_kernel(%arg0: i32, %arg1: memref<8x32xf32, #tpu.memory_space<vmem>>, %arg2: memref<1x8x32xf32, #tpu.memory_space<vmem>>, %arg3: memref<64x32xbf16, #tpu.memory_space<vmem>>, %arg4: memref<1x32xf32, #tpu.memory_space<vmem>>, %arg5: memref<8x32xf32, #tpu.memory_space<vmem>>) attributes {dimension_semantics = [#tpu.dimension_semantics<parallel>], iteration_bounds = array<i64: 2>, scalar_prefetch = 0 : i64, scratch_operands = 0 : i64, tpu.core_type = #tpu.core_type<tc>, window_params = [{transform_indices = @transform_0, window_bounds = array<i64: 8, 32>}, {transform_indices = @transform_1, window_bounds = array<i64: 1, 8, 32>}, {pipeline_mode = #tpu.pipeline_mode<synchronous>, transform_indices = @transform_2, window_bounds = array<i64: 64, 32>}, {pipeline_mode = #tpu.pipeline_mode<synchronous>, transform_indices = @transform_3, window_bounds = array<i64: 1, 32>}, {transform_indices = @transform_4, window_bounds = array<i64: 8, 32>}]} {
    %c0 = arith.constant 0 : index
    %c0_0 = arith.constant 0 : index
    %0 = vector.load %arg3[%c0, %c0_0] : memref<64x32xbf16, #tpu.memory_space<vmem>>, vector<32x32xbf16>
    %c32 = arith.constant 32 : index
    %c0_1 = arith.constant 0 : index
    %1 = vector.load %arg3[%c32, %c0_1] : memref<64x32xbf16, #tpu.memory_space<vmem>>, vector<32x32xbf16>
    %c0_2 = arith.constant 0 : index
    %c0_3 = arith.constant 0 : index
    %2 = vector.load %arg1[%c0_2, %c0_3] : memref<8x32xf32, #tpu.memory_space<vmem>>, vector<8x32xf32>
    %3 = arith.truncf %2 : vector<8x32xf32> to vector<8x32xbf16>
    %cst = arith.constant dense<0.000000e+00> : vector<8x32xf32>
    %4 = tpu.matmul %3, %1, %cst {dimension_numbers = #tpu.dot_dimension_numbers<[1], [0], [0], [1], [0, 0, 1, 1], [], []>} : vector<8x32xbf16>, vector<32x32xbf16>, vector<8x32xf32> -> vector<8x32xf32>
    %c0_4 = arith.constant 0 : index
    %c0_5 = arith.constant 0 : index
    %c0_6 = arith.constant 0 : index
    %5 = vector.load %arg2[%c0_4, %c0_5, %c0_6] : memref<1x8x32xf32, #tpu.memory_space<vmem>>, vector<1x8x32xf32>
    %6 = vector.shape_cast %5 : vector<1x8x32xf32> to vector<8x32xf32>
    %7 = arith.truncf %6 : vector<8x32xf32> to vector<8x32xbf16>
    %cst_7 = arith.constant dense<0.000000e+00> : vector<8x32xf32>
    %8 = tpu.matmul %7, %0, %cst_7 {dimension_numbers = #tpu.dot_dimension_numbers<[1], [0], [0], [1], [0, 0, 1, 1], [], []>} : vector<8x32xbf16>, vector<32x32xbf16>, vector<8x32xf32> -> vector<8x32xf32>
    %9 = arith.addf %4, %8 : vector<8x32xf32>
    %c0_8 = arith.constant 0 : index
    %c0_9 = arith.constant 0 : index
    %10 = vector.load %arg4[%c0_8, %c0_9] : memref<1x32xf32, #tpu.memory_space<vmem>>, vector<1x32xf32>
    %11 = vector.broadcast %10 : vector<1x32xf32> to vector<8x32xf32>
    %12 = arith.addf %9, %11 : vector<8x32xf32>
    %13 = math.tanh %12 : vector<8x32xf32>
    %c0_10 = arith.constant 0 : index
    %c0_11 = arith.constant 0 : index
    %14 = vector.load %arg5[%c0_10, %c0_11] : memref<8x32xf32, #tpu.memory_space<vmem>>, vector<8x32xf32>
    tpu.vector_store %arg5[%c0_10, %c0_11], %13 {strides = array<i32>} : memref<8x32xf32, #tpu.memory_space<vmem>>, vector<8x32xf32>,
    return
  }
  func.func @transform_0(%arg0: i32) -> (i32, i32) {
    %c0_i32 = arith.constant 0 : i32
    %c0_i32_0 = arith.constant 0 : i32
    return %arg0, %c0_i32 : i32, i32
  }
  func.func @transform_1(%arg0: i32) -> (i32, i32, i32) {
    %c0_i32 = arith.constant 0 : i32
    %c0_i32_0 = arith.constant 0 : i32
    %c0_i32_1 = arith.constant 0 : i32
    return %arg0, %c0_i32, %c0_i32_0 : i32, i32, i32
  }
  func.func @transform_2(%arg0: i32) -> (i32, i32) {
    %c0_i32 = arith.constant 0 : i32
    %c0_i32_0 = arith.constant 0 : i32
    %c0_i32_1 = arith.constant 0 : i32
    return %c0_i32, %c0_i32_0 : i32, i32
  }
  func.func @transform_3(%arg0: i32) -> (i32, i32) {
    %c0_i32 = arith.constant 0 : i32
    %c0_i32_0 = arith.constant 0 : i32
    %c0_i32_1 = arith.constant 0 : i32
    return %c0_i32, %c0_i32_0 : i32, i32
  }
  func.func @transform_4(%arg0: i32) -> (i32, i32) {
    %c0_i32 = arith.constant 0 : i32
    %c0_i32_0 = arith.constant 0 : i32
    return %arg0, %c0_i32 : i32, i32
  }
}

</mosaic_0001>

<llo_original>
// kernel: tpu_custom_call.1
$region0: #{tpu_custom_call.1}
  #allocation0 [shape = 'u32[]', space=smem, size = 0x4, offset = 0x4, fixed_abs, tag = 'smem constant byte address 0x4 - core index']
  #allocation1 [shape = 'u32[144,128]{1,0:T(1,128)}', space=vmem, size = 0x12000, scoped, tag = 'internal scratch']
  %s0 = inlined_call_operand.vmem [shape: f32[16,32], index: 0, kind: input, shape index: {}]
  %s1 = inlined_call_operand.vmem [shape: f32[2,8,32], index: 1, kind: input, shape index: {}]
  %s2 = inlined_call_operand.vmem [shape: bf16[64,32], index: 2, kind: input, shape index: {}]
  %s3 = inlined_call_operand.vmem [shape: f32[1,32], index: 3, kind: input, shape index: {}]
  %s4 = inlined_call_operand.hbm [shape: f32[16,32], index: 4, kind: output, shape index: {}]
  %s5 = sld [smem:[#allocation0]]
  $region49: #{tpu_custom_call.1} parent=0
    _
  %s7 = ssub.s32 1, %s5
  %s8 = scalar_select 0, %s7, %s5
  $region1: #{tpu_custom_call.1} parent=0
    #allocation2 [shape = 'u8[8192]{0}', space=vmem, size = 0x2000, scoped, tag = 'output window, operand 0']
    #allocation3 [shape = 's32[2]{0}', space=sflag, size = 0x8, scoped, tag = 'scoped memory for tpu_custom_call.1']
    %9 = vsyncpa [#allocation3], 0
    %s10 = scalar_lea.sflag [#allocation3], 1
    %11 = vsyncpa %s10, 0
    loop: start=0, step=1, limit=4
    $region2: #{tpu_custom_call.1} parent=1 // loop_pre_header
      _
    $region3: #{tpu_custom_call.1} parent=1 // loop_header
      %s13 = sphi 0, %s17
      %p14 = scmp.ge.s32.totalorder %s13, 4
      %s23 = sphi 0, %s25
      %s26 = sphi 0, %s23
      %s27 = sphi 0, %s26
      %s43 = sphi 0, %s27
      %s49 = sphi 0, %s51
      %s52 = sphi 0, %s49
      %s53 = sphi 0, %s52
      %s69 = sphi 0, %s53
      %s73 = sphi 0, %s73
      %s75 = sphi 0, %s73
      %s76 = sphi 0, %s75
      %s90 = sphi 0, %s76
      %s94 = sphi 0, %s94
      %s96 = sphi 0, %s94
      %s97 = sphi 0, %s96
      %s111 = sphi 0, %s97
      %s117 = sphi 0, %s119
      %s120 = sphi 0, %s117
      %s121 = sphi 0, %s120
      %s137 = sphi 0, %s121
    $region4: #{tpu_custom_call.1} parent=1 // loop_header_branch
      %16 = sbr.rel (%p14) target = $region8
    $region5: #{tpu_custom_call.1} parent=1 // loop_body
      %s18 = ssub.s32 %s13, 1
      %s19 = ssub.s32 %s13, 2
      %s20 = sadd.s32 %s13, 1
      %s21 = ssub.s32 %s13, %s20
      %p22 = scmp.eq.s32.totalorder %s21, 0
      %s24 = sadd.s32 %s23, 1
      %s25 = scalar_select %p22, %s23, %s24
      %p28 = pneg %p22
      %p29 = scmp.eq.s32.totalorder %s13, 1
      %p30 = por %p28, %p29
      %p31 = scmp.ne.s32.totalorder %s23, %s26
      %p32 = scmp.eq.s32.totalorder %s13, 0
      %p33 = por %p31, %p32
      %p34 = scmp.ne.s32.totalorder %s23, %s26
      %p35 = scmp.eq.s32.totalorder %s18, 1
      %p36 = por %p34, %p35
      %p37 = scmp.ne.s32.totalorder %s26, %s27
      %p38 = scmp.eq.s32.totalorder %s18, 0
      %p39 = por %p37, %p38
      %p40 = scmp.ne.s32.totalorder %s26, %s27
      %p41 = scmp.eq.s32.totalorder %s19, 1
      %p42 = por %p40, %p41
      %p44 = scmp.ne.s32.totalorder %s27, %s43
      %p45 = scmp.eq.s32.totalorder %s19, 0
      %p46 = por %p44, %p45
      %s47 = ssub.s32 %s13, %s20
      %p48 = scmp.eq.s32.totalorder %s47, 0
      %s50 = sadd.s32 %s49, 1
      %s51 = scalar_select %p48, %s49, %s50
      %p54 = pneg %p48
      %p55 = scmp.eq.s32.totalorder %s13, 1
      %p56 = por %p54, %p55
      %p57 = scmp.ne.s32.totalorder %s49, %s52
      %p58 = scmp.eq.s32.totalorder %s13, 0
      %p59 = por %p57, %p58
      %p60 = scmp.ne.s32.totalorder %s49, %s52
      %p61 = scmp.eq.s32.totalorder %s18, 1
      %p62 = por %p60, %p61
      %p63 = scmp.ne.s32.totalorder %s52, %s53
      %p64 = scmp.eq.s32.totalorder %s18, 0
      %p65 = por %p63, %p64
      %p66 = scmp.ne.s32.totalorder %s52, %s53
      %p67 = scmp.eq.s32.totalorder %s19, 1
      %p68 = por %p66, %p67
      %p70 = scmp.ne.s32.totalorder %s53, %s69
      %p71 = scmp.eq.s32.totalorder %s19, 0
      %p72 = por %p70, %p71
      %s74 = sadd.s32 %s73, 1
      %p77 = scmp.eq.s32.totalorder %s13, 1
      %p78 = scmp.ne.s32.totalorder %s73, %s75
      %p79 = scmp.eq.s32.totalorder %s13, 0
      %p80 = por %p78, %p79
      %p81 = scmp.ne.s32.totalorder %s73, %s75
      %p82 = scmp.eq.s32.totalorder %s18, 1
      %p83 = por %p81, %p82
      %p84 = scmp.ne.s32.totalorder %s75, %s76
      %p85 = scmp.eq.s32.totalorder %s18, 0
      %p86 = por %p84, %p85
      %p87 = scmp.ne.s32.totalorder %s75, %s76
      %p88 = scmp.eq.s32.totalorder %s19, 1
      %p89 = por %p87, %p88
      %p91 = scmp.ne.s32.totalorder %s76, %s90
      %p92 = scmp.eq.s32.totalorder %s19, 0
      %p93 = por %p91, %p92
      %s95 = sadd.s32 %s94, 1
      %p98 = scmp.eq.s32.totalorder %s13, 1
      %p99 = scmp.ne.s32.totalorder %s94, %s96
      %p100 = scmp.eq.s32.totalorder %s13, 0
      %p101 = por %p99, %p100
      %p102 = scmp.ne.s32.totalorder %s94, %s96
      %p103 = scmp.eq.s32.totalorder %s18, 1
      %p104 = por %p102, %p103
      %p105 = scmp.ne.s32.totalorder %s96, %s97
      %p106 = scmp.eq.s32.totalorder %s18, 0
      %p107 = por %p105, %p106
      %p108 = scmp.ne.s32.totalorder %s96, %s97
      %p109 = scmp.eq.s32.totalorder %s19, 1
      %p110 = por %p108, %p109
      %p112 = scmp.ne.s32.totalorder %s97, %s111
      %p113 = scmp.eq.s32.totalorder %s19, 0
      %p114 = por %p112, %p113
      %s115 = ssub.s32 %s13, %s20
      %p116 = scmp.eq.s32.totalorder %s115, 0
      %s118 = sadd.s32 %s117, 1
      %s119 = scalar_select %p116, %s117, %s118
      %p122 = pneg %p116
      %p123 = scmp.eq.s32.totalorder %s13, 1
      %p124 = por %p122, %p123
      %p125 = scmp.ne.s32.totalorder %s117, %s120
      %p126 = scmp.eq.s32.totalorder %s13, 0
      %p127 = por %p125, %p126
      %p128 = scmp.ne.s32.totalorder %s117, %s120
      %p129 = scmp.eq.s32.totalorder %s18, 1
      %p130 = por %p128, %p129
      %p131 = scmp.ne.s32.totalorder %s120, %s121
      %p132 = scmp.eq.s32.totalorder %s18, 0
      %p133 = por %p131, %p132
      %p134 = scmp.ne.s32.totalorder %s120, %s121
      %p135 = scmp.eq.s32.totalorder %s19, 1
      %p136 = por %p134, %p135
      %p138 = scmp.ne.s32.totalorder %s121, %s137
      %p139 = scmp.eq.s32.totalorder %s19, 0
      %p140 = por %p138, %p139
      %p141 = scmp.le.s32.totalorder 1, %s13
      %p142 = scmp.lt.s32.totalorder %s13, 3
      %p143 = pnand %p141, %p142
      %p144 = pneg %p143
      // Predicated region
      $region9: #{tpu_custom_call.1} parent=5 // pred_check
        _
      $region10: #{tpu_custom_call.1} parent=5 // pred_check_branch
        %146 = sbr.rel (%p143) target = $region12
      $region11: #{tpu_custom_call.1} parent=5 // pred_region
        %s147 = ssub.s32 %s13, 1
        // Predicated region
        $region13: #{tpu_custom_call.1} parent=11 // pred_check
          %p148 = pneg %p86
        $region14: #{tpu_custom_call.1} parent=11 // pred_check_branch
          %150 = sbr.rel (%p148) target = $region16
        $region15: #{tpu_custom_call.1} parent=11 // pred_region
          _
        $region16: #{tpu_custom_call.1} parent=11 // pred_fallthru
          _
        // Predicated region
        $region17: #{tpu_custom_call.1} parent=11 // pred_check
          %p151 = pneg %p107
        $region18: #{tpu_custom_call.1} parent=11 // pred_check_branch
          %153 = sbr.rel (%p151) target = $region20
        $region19: #{tpu_custom_call.1} parent=11 // pred_region
          _
        $region20: #{tpu_custom_call.1} parent=11 // pred_fallthru
          _
      $region12: #{tpu_custom_call.1} parent=5 // pred_fallthru
        _
      %p154 = scmp.lt.s32.totalorder %s13, 2
      // Predicated region
      $region21: #{tpu_custom_call.1} parent=5 // pred_check
        %p155 = pneg %p154
      $region22: #{tpu_custom_call.1} parent=5 // pred_check_branch
        %157 = sbr.rel (%p155) target = $region24
      $region23: #{tpu_custom_call.1} parent=5 // pred_region
        // Predicated region
        $region25: #{tpu_custom_call.1} parent=23 // pred_check
          %p158 = pneg %p33
        $region26: #{tpu_custom_call.1} parent=23 // pred_check_branch
          %160 = sbr.rel (%p158) target = $region28
        $region27: #{tpu_custom_call.1} parent=23 // pred_region
          %p161 = scmp.lt.s32.totalorder %s13, 1
          %s162 = scalar_select %p161, %s13, 1
          %s163 = smul.addr %s162, 8
          %s164 = scalar_lea.vmem %s0, %s163
        $region28: #{tpu_custom_call.1} parent=23 // pred_fallthru
          _
        // Predicated region
        $region29: #{tpu_custom_call.1} parent=23 // pred_check
          %p165 = pneg %p59
        $region30: #{tpu_custom_call.1} parent=23 // pred_check_branch
          %167 = sbr.rel (%p165) target = $region32
        $region31: #{tpu_custom_call.1} parent=23 // pred_region
          %p168 = scmp.lt.s32.totalorder %s13, 1
          %s169 = scalar_select %p168, %s13, 1
          %s170 = smul.addr %s169, 8
          %s171 = scalar_lea.vmem %s1, %s170
        $region32: #{tpu_custom_call.1} parent=23 // pred_fallthru
          _
      $region24: #{tpu_custom_call.1} parent=5 // pred_fallthru
        _
      %p172 = scmp.le.s32.totalorder 1, %s13
      %p173 = scmp.lt.s32.totalorder %s13, 3
      %p174 = pnand %p172, %p173
      %p175 = pneg %p174
      // Predicated region
      $region33: #{tpu_custom_call.1} parent=5 // pred_check
        _
      $region34: #{tpu_custom_call.1} parent=5 // pred_check_branch
        %177 = sbr.rel (%p174) target = $region36
      $region35: #{tpu_custom_call.1} parent=5 // pred_region
        %s178 = ssub.s32 %s13, 1
        %p179 = scmp.lt.s32.totalorder %s18, 1
        %s180 = scalar_select %p179, %s18, 1
        %s181 = smul.addr %s180, 8
        %s182 = scalar_lea.vmem %s0, %s181
        %p183 = pneg %p39
        %p184 = pneg %p36
        %p185 = scmp.lt.s32.totalorder %s18, 1
        %s186 = scalar_select %p185, %s18, 1
        %s187 = smul.addr %s186, 8
        %s188 = scalar_lea.vmem %s1, %s187
        %p189 = pneg %p65
        %p190 = pneg %p62
        %p191 = pneg %p86
        %p192 = pneg %p83
        %p193 = pneg %p107
        %p194 = pneg %p104
        %p195 = pneg %p133
        %p196 = pneg %p130
        %s197 = sand.u32 %s120, 1
        %s198 = scalar_lea.sflag [#allocation3], %s197
        %s199 = sand.u32 %s120, 1
        %s200 = smul.addr %s199, 8
        %s201 = scalar_lea.vmem [#allocation2], %s200
        %p202 = scmp.lt.s32.totalorder %s18, 1
        %s203 = scalar_select %p202, %s18, 1
        %s204 = smul.addr %s203, 8
        %s205 = scalar_lea.vmem %s0, %s204
        %p206 = scmp.lt.s32.totalorder %s18, 1
        %s207 = scalar_select %p206, %s18, 1
        %s208 = smul.addr %s207, 8
        %s209 = scalar_lea.vmem %s1, %s208
        %v211 = vld [vmem:[%s2] sm:$0xf]
        %v212 = vld [vmem:[%s2 + $0x4] sm:$0xf]
        %v213 = vld [vmem:[%s2 + $0x8] sm:$0xf]
        %v214 = vld [vmem:[%s2 + $0xc] sm:$0xf]
        %v215 = vld [vmem:[%s2 + $0x10] sm:$0xf]
        %v216 = vld [vmem:[%s2 + $0x14] sm:$0xf]
        %v217 = vld [vmem:[%s2 + $0x18] sm:$0xf]
        %v218 = vld [vmem:[%s2 + $0x1c] sm:$0xf]
        %v219 = vld [vmem:[%s205] sm:$0xff]
        %v220 = vpack.c.bf16 %v219, %v219
        %v221 = vld [vmem:[%s209] sm:$0xff]
        %v222 = vpack.c.bf16 %v221, %v221
        %v227 = vunpack.c.l.b16 %v211
        %v228 = vunpack.c.l.b16 %v212
        %v229 = vunpack.c.l.b16 %v213
        %v230 = vunpack.c.l.b16 %v214
        %v231 = vpack.c.b16 %v228, %v227
        %v232 = vpack.c.b16 %v230, %v229
        %vm235 = vcmask 261120
        %v237 = vsel %vm235, %v222, 0
        %239 = vmatprep.subr.bf16.mxu0 0
        %240 = vmatpush1.bf16.msra.mxu0 0
        %241 = vmatprep.subr.bf16.mxu0 0
        %242 = vmatpush1.bf16.msra.mxu0 0
        %243 = vmatprep.subr.bf16.mxu0 0
        %244 = vmatpush1.bf16.msra.mxu0 0
        %245 = vmatprep.subr.bf16.mxu0 0
        %246 = vmatpush1.bf16.msra.mxu0 0
        %247 = vmatprep.subr.bf16.mxu0 0
        %248 = vmatpush1.bf16.msra.mxu0 0
        %249 = vmatprep.subr.bf16.mxu0 0
        %250 = vmatpush1.bf16.msra.mxu0 0
        %251 = vmatprep.subr.bf16.mxu0 0
        %252 = vmatpush1.bf16.msra.mxu0 %v232
        %253 = vmatprep.subr.bf16.mxu0 0
        %254 = vmatpush1.bf16.msra.mxu0 %v231
        %255 = vmatprep.subr.bf16.mxu0 0
        %256 = vmatpush2.bf16.msra.mxu0 0
        %257 = vmatprep.subr.bf16.mxu0 0
        %258 = vmatpush2.bf16.msra.mxu0 0
        %259 = vmatprep.subr.bf16.mxu0 0
        %260 = vmatpush2.bf16.msra.mxu0 0
        %261 = vmatprep.subr.bf16.mxu0 0
        %262 = vmatpush2.bf16.msra.mxu0 0
        %263 = vmatprep.subr.bf16.mxu0 0
        %264 = vmatpush2.bf16.msra.mxu0 0
        %265 = vmatprep.subr.bf16.mxu0 0
        %266 = vmatpush2.bf16.msra.mxu0 0
        %267 = vmatprep.subr.bf16.mxu0 0
        %268 = vmatpush2.bf16.msra.mxu0 0
        %269 = vmatprep.subr.bf16.mxu0 0
        %270 = vmatpush2.bf16.msra.mxu0 0
        %271 = vmatprep.mubr.bf16.mxu0 0
        %272 = vmatmul.mubr.bf16.gmra.mxu0 %v237
        %v273 = vpop.f32.mrf.mxu0
        %v274 = vadd.f32 0.0, %v273
        %v275 = vpop.f32.mrf.mxu0
        %v276 = vpop.f32.mrf.mxu0
        %v277 = vpop.f32.mrf.mxu0
        %278 = vdwg.mxu0
        %v283 = vunpack.c.l.b16 %v215
        %v284 = vunpack.c.l.b16 %v216
        %v285 = vunpack.c.l.b16 %v217
        %v286 = vunpack.c.l.b16 %v218
        %v287 = vpack.c.b16 %v284, %v283
        %v288 = vpack.c.b16 %v286, %v285
        %v292 = vsel %vm235, %v220, 0
        %294 = vmatprep.subr.bf16.mxu0 0
        %295 = vmatpush1.bf16.msra.mxu0 0
        %296 = vmatprep.subr.bf16.mxu0 0
        %297 = vmatpush1.bf16.msra.mxu0 0
        %298 = vmatprep.subr.bf16.mxu0 0
        %299 = vmatpush1.bf16.msra.mxu0 0
        %300 = vmatprep.subr.bf16.mxu0 0
        %301 = vmatpush1.bf16.msra.mxu0 0
        %302 = vmatprep.subr.bf16.mxu0 0
        %303 = vmatpush1.bf16.msra.mxu0 0
        %304 = vmatprep.subr.bf16.mxu0 0
        %305 = vmatpush1.bf16.msra.mxu0 0
        %306 = vmatprep.subr.bf16.mxu0 0
        %307 = vmatpush1.bf16.msra.mxu0 %v288
        %308 = vmatprep.subr.bf16.mxu0 0
        %309 = vmatpush1.bf16.msra.mxu0 %v287
        %310 = vmatprep.subr.bf16.mxu0 0
        %311 = vmatpush2.bf16.msra.mxu0 0
        %312 = vmatprep.subr.bf16.mxu0 0
        %313 = vmatpush2.bf16.msra.mxu0 0
        %314 = vmatprep.subr.bf16.mxu0 0
        %315 = vmatpush2.bf16.msra.mxu0 0
        %316 = vmatprep.subr.bf16.mxu0 0
        %317 = vmatpush2.bf16.msra.mxu0 0
        %318 = vmatprep.subr.bf16.mxu0 0
        %319 = vmatpush2.bf16.msra.mxu0 0
        %320 = vmatprep.subr.bf16.mxu0 0
        %321 = vmatpush2.bf16.msra.mxu0 0
        %322 = vmatprep.subr.bf16.mxu0 0
        %323 = vmatpush2.bf16.msra.mxu0 0
        %324 = vmatprep.subr.bf16.mxu0 0
        %325 = vmatpush2.bf16.msra.mxu0 0
        %326 = vmatprep.mubr.bf16.mxu0 0
        %327 = vmatmul.mubr.bf16.gmra.mxu0 %v292
        %v328 = vpop.f32.mrf.mxu0
        %v329 = vadd.f32 %v274, %v328
        %v330 = vpop.f32.mrf.mxu0
        %v331 = vpop.f32.mrf.mxu0
        %v332 = vpop.f32.mrf.mxu0
        %333 = vdwg.mxu0
        %v334 = vld [vmem:[%s3] sm:$0x1]
        %v336 = vlaneseq
        %v337 = vshrl.u32 %v336, 7
        %v338 = vsub.s32 0, %v337
        %v339 = vrot.slane %v334, %v338
        %v341 = vadd.f32 %v329, %v339
        %v342 = vtanh.pop %v341
        %343 = vst.msk [vmem:[%s201] sm:$0xff] %vm235, %v342
        %s344 = sand.u32 %s120, 1
        %s345 = scalar_lea.sflag [#allocation3], %s344
        %s346 = sand.u32 %s120, 1
        %s347 = smul.addr %s346, 8
        %s348 = scalar_lea.vmem [#allocation2], %s347
        // Predicated region
        $region37: #{tpu_custom_call.1} parent=35 // pred_check
          %p349 = pneg %p130
        $region38: #{tpu_custom_call.1} parent=35 // pred_check_branch
          %351 = sbr.rel (%p349) target = $region40
        $region39: #{tpu_custom_call.1} parent=35 // pred_region
          %s353 = ssub.s32 128, 128
          %354 = vsyncadd %s345, %s353
          %s355 = smul.addr %s18, 128
          %s356 = scalar_lea.hbm %s4, %s355
          %s358 = sshll.u32 %s348, 4
          %s359 = int_to_ptr.vmem [resolvable:$true] %s358
          %361 = dma.vmem_to_hbm [thread:$0]  %s359, 128, %s356, %s345
        $region40: #{tpu_custom_call.1} parent=35 // pred_fallthru
          _
      $region36: #{tpu_custom_call.1} parent=5 // pred_fallthru
        _
      %p362 = scmp.le.s32.totalorder 2, %s13
      // Predicated region
      $region41: #{tpu_custom_call.1} parent=5 // pred_check
        %p363 = pneg %p362
      $region42: #{tpu_custom_call.1} parent=5 // pred_check_branch
        %365 = sbr.rel (%p363) target = $region44
      $region43: #{tpu_custom_call.1} parent=5 // pred_region
        %s366 = ssub.s32 %s13, 2
        // Predicated region
        $region45: #{tpu_custom_call.1} parent=43 // pred_check
          %p367 = pneg %p136
        $region46: #{tpu_custom_call.1} parent=43 // pred_check_branch
          %369 = sbr.rel (%p367) target = $region48
        $region47: #{tpu_custom_call.1} parent=43 // pred_region
          %s370 = sand.u32 %s121, 1
          %s371 = scalar_lea.sflag [#allocation3], %s370
          %s372 = sand.u32 %s121, 1
          %s373 = smul.addr %s372, 8
          %s374 = scalar_lea.vmem [#allocation2], %s373
          %375 = dma.done %s371, 128
        $region48: #{tpu_custom_call.1} parent=43 // pred_fallthru
          _
      $region44: #{tpu_custom_call.1} parent=5 // pred_fallthru
        _
    $region6: #{tpu_custom_call.1} parent=1 // loop_footer
      %s17 = sadd.s32 1, %s13
    $region7: #{tpu_custom_call.1} parent=1 // loop_footer_branch
      %12 = sbr.rel target = $region3
    $region8: #{tpu_custom_call.1} parent=1 // loop_exit
      _
    %376 = vsyncpa [#allocation3], 1
    %s377 = scalar_lea.sflag [#allocation3], 1
    %378 = vsyncpa %s377, 1

// kernel: tpu_custom_call.1
$region0: #{tpu_custom_call.1}
  #allocation0 [shape = 'u32[]', space=smem, size = 0x4, offset = 0x4, fixed_abs, tag = 'smem constant byte address 0x4 - core index']
  #allocation1 [shape = 'u32[144,128]{1,0:T(1,128)}', space=vmem, size = 0x12000, scoped, tag = 'internal scratch']
  %s0 = inlined_call_operand.vmem [shape: f32[16,32], index: 0, kind: input, shape index: {}]
  %s1 = inlined_call_operand.vmem [shape: f32[2,8,32], index: 1, kind: input, shape index: {}]
  %s2 = inlined_call_operand.vmem [shape: bf16[64,32], index: 2, kind: input, shape index: {}]
  %s3 = inlined_call_operand.vmem [shape: f32[1,32], index: 3, kind: input, shape index: {}]
  %s4 = inlined_call_operand.hbm [shape: f32[16,32], index: 4, kind: output, shape index: {}]
  %s5 = sld [smem:[#allocation0]]
  $region49: #{tpu_custom_call.1} parent=0
    _
  %s7 = ssub.s32 1, %s5
  %s8 = scalar_select 0, %s7, %s5
  $region1: #{tpu_custom_call.1} parent=0
    #allocation2 [shape = 'u8[8192]{0}', space=vmem, size = 0x2000, scoped, tag = 'output window, operand 0']
    #allocation3 [shape = 's32[2]{0}', space=sflag, size = 0x8, scoped, tag = 'scoped memory for tpu_custom_call.1']
    %9 = vsyncpa [#allocation3], 0
    %s10 = scalar_lea.sflag [#allocation3], 1
    %11 = vsyncpa %s10, 0
    loop: start=0, step=1, limit=4
    $region2: #{tpu_custom_call.1} parent=1 // loop_pre_header
      _
    $region3: #{tpu_custom_call.1} parent=1 // loop_header
      %s13 = sphi 0, %s17
      %p14 = scmp.ge.s32.totalorder %s13, 4
      %s23 = sphi 0, %s25
      %s26 = sphi 0, %s23
      %s27 = sphi 0, %s26
      %s43 = sphi 0, %s27
      %s49 = sphi 0, %s51
      %s52 = sphi 0, %s49
      %s53 = sphi 0, %s52
      %s69 = sphi 0, %s53
      %s73 = sphi 0, %s73
      %s75 = sphi 0, %s73
      %s76 = sphi 0, %s75
      %s90 = sphi 0, %s76
      %s94 = sphi 0, %s94
      %s96 = sphi 0, %s94
      %s97 = sphi 0, %s96
      %s111 = sphi 0, %s97
      %s117 = sphi 0, %s119
      %s120 = sphi 0, %s117
      %s121 = sphi 0, %s120
      %s137 = sphi 0, %s121
    $region4: #{tpu_custom_call.1} parent=1 // loop_header_branch
      %16 = sbr.rel (%p14) target = $region8
    $region5: #{tpu_custom_call.1} parent=1 // loop_body
      %s18 = ssub.s32 %s13, 1
      %s19 = ssub.s32 %s13, 2
      %s20 = sadd.s32 %s13, 1
      %s21 = ssub.s32 %s13, %s20
      %p22 = scmp.eq.s32.totalorder %s21, 0
      %s24 = sadd.s32 %s23, 1
      %s25 = scalar_select %p22, %s23, %s24
      %p28 = pneg %p22
      %p29 = scmp.eq.s32.totalorder %s13, 1
      %p30 = por %p28, %p29
      %p31 = scmp.ne.s32.totalorder %s23, %s26
      %p32 = scmp.eq.s32.totalorder %s13, 0
      %p33 = por %p31, %p32
      %p34 = scmp.ne.s32.totalorder %s23, %s26
      %p35 = scmp.eq.s32.totalorder %s18, 1
      %p36 = por %p34, %p35
      %p37 = scmp.ne.s32.totalorder %s26, %s27
      %p38 = scmp.eq.s32.totalorder %s18, 0
      %p39 = por %p37, %p38
      %p40 = scmp.ne.s32.totalorder %s26, %s27
      %p41 = scmp.eq.s32.totalorder %s19, 1
      %p42 = por %p40, %p41
      %p44 = scmp.ne.s32.totalorder %s27, %s43
      %p45 = scmp.eq.s32.totalorder %s19, 0
      %p46 = por %p44, %p45
      %s47 = ssub.s32 %s13, %s20
      %p48 = scmp.eq.s32.totalorder %s47, 0
      %s50 = sadd.s32 %s49, 1
      %s51 = scalar_select %p48, %s49, %s50
      %p54 = pneg %p48
      %p55 = scmp.eq.s32.totalorder %s13, 1
      %p56 = por %p54, %p55
      %p57 = scmp.ne.s32.totalorder %s49, %s52
      %p58 = scmp.eq.s32.totalorder %s13, 0
      %p59 = por %p57, %p58
      %p60 = scmp.ne.s32.totalorder %s49, %s52
      %p61 = scmp.eq.s32.totalorder %s18, 1
      %p62 = por %p60, %p61
      %p63 = scmp.ne.s32.totalorder %s52, %s53
      %p64 = scmp.eq.s32.totalorder %s18, 0
      %p65 = por %p63, %p64
      %p66 = scmp.ne.s32.totalorder %s52, %s53
      %p67 = scmp.eq.s32.totalorder %s19, 1
      %p68 = por %p66, %p67
      %p70 = scmp.ne.s32.totalorder %s53, %s69
      %p71 = scmp.eq.s32.totalorder %s19, 0
      %p72 = por %p70, %p71
      %s74 = sadd.s32 %s73, 1
      %p77 = scmp.eq.s32.totalorder %s13, 1
      %p78 = scmp.ne.s32.totalorder %s73, %s75
      %p79 = scmp.eq.s32.totalorder %s13, 0
      %p80 = por %p78, %p79
      %p81 = scmp.ne.s32.totalorder %s73, %s75
      %p82 = scmp.eq.s32.totalorder %s18, 1
      %p83 = por %p81, %p82
      %p84 = scmp.ne.s32.totalorder %s75, %s76
      %p85 = scmp.eq.s32.totalorder %s18, 0
      %p86 = por %p84, %p85
      %p87 = scmp.ne.s32.totalorder %s75, %s76
      %p88 = scmp.eq.s32.totalorder %s19, 1
      %p89 = por %p87, %p88
      %p91 = scmp.ne.s32.totalorder %s76, %s90
      %p92 = scmp.eq.s32.totalorder %s19, 0
      %p93 = por %p91, %p92
      %s95 = sadd.s32 %s94, 1
      %p98 = scmp.eq.s32.totalorder %s13, 1
      %p99 = scmp.ne.s32.totalorder %s94, %s96
      %p100 = scmp.eq.s32.totalorder %s13, 0
      %p101 = por %p99, %p100
      %p102 = scmp.ne.s32.totalorder %s94, %s96
      %p103 = scmp.eq.s32.totalorder %s18, 1
      %p104 = por %p102, %p103
      %p105 = scmp.ne.s32.totalorder %s96, %s97
      %p106 = scmp.eq.s32.totalorder %s18, 0
      %p107 = por %p105, %p106
      %p108 = scmp.ne.s32.totalorder %s96, %s97
      %p109 = scmp.eq.s32.totalorder %s19, 1
      %p110 = por %p108, %p109
      %p112 = scmp.ne.s32.totalorder %s97, %s111
      %p113 = scmp.eq.s32.totalorder %s19, 0
      %p114 = por %p112, %p113
      %s115 = ssub.s32 %s13, %s20
      %p116 = scmp.eq.s32.totalorder %s115, 0
      %s118 = sadd.s32 %s117, 1
      %s119 = scalar_select %p116, %s117, %s118
      %p122 = pneg %p116
      %p123 = scmp.eq.s32.totalorder %s13, 1
      %p124 = por %p122, %p123
      %p125 = scmp.ne.s32.totalorder %s117, %s120
      %p126 = scmp.eq.s32.totalorder %s13, 0
      %p127 = por %p125, %p126
      %p128 = scmp.ne.s32.totalorder %s117, %s120
      %p129 = scmp.eq.s32.totalorder %s18, 1
      %p130 = por %p128, %p129
      %p131 = scmp.ne.s32.totalorder %s120, %s121
      %p132 = scmp.eq.s32.totalorder %s18, 0
      %p133 = por %p131, %p132
      %p134 = scmp.ne.s32.totalorder %s120, %s121
      %p135 = scmp.eq.s32.totalorder %s19, 1
      %p136 = por %p134, %p135
      %p138 = scmp.ne.s32.totalorder %s121, %s137
      %p139 = scmp.eq.s32.totalorder %s19, 0
      %p140 = por %p138, %p139
      %p141 = scmp.le.s32.totalorder 1, %s13
      %p142 = scmp.lt.s32.totalorder %s13, 3
      %p143 = pnand %p141, %p142
      %p144 = pneg %p143
      // Predicated region
      $region9: #{tpu_custom_call.1} parent=5 // pred_check
        _
      $region10: #{tpu_custom_call.1} parent=5 // pred_check_branch
        %146 = sbr.rel (%p143) target = $region12
      $region11: #{tpu_custom_call.1} parent=5 // pred_region
        %s147 = ssub.s32 %s13, 1
        // Predicated region
        $region13: #{tpu_custom_call.1} parent=11 // pred_check
          %p148 = pneg %p86
        $region14: #{tpu_custom_call.1} parent=11 // pred_check_branch
          %150 = sbr.rel (%p148) target = $region16
        $region15: #{tpu_custom_call.1} parent=11 // pred_region
          _
        $region16: #{tpu_custom_call.1} parent=11 // pred_fallthru
          _
        // Predicated region
        $region17: #{tpu_custom_call.1} parent=11 // pred_check
          %p151 = pneg %p107
        $region18: #{tpu_custom_call.1} parent=11 // pred_check_branch
          %153 = sbr.rel (%p151) target = $region20
        $region19: #{tpu_custom_call.1} parent=11 // pred_region
          _
        $region20: #{tpu_custom_call.1} parent=11 // pred_fallthru
          _
      $region12: #{tpu_custom_call.1} parent=5 // pred_fallthru
        _
      %p154 = scmp.lt.s32.totalorder %s13, 2
      // Predicated region
      $region21: #{tpu_custom_call.1} parent=5 // pred_check
        %p155 = pneg %p154
      $region22: #{tpu_custom_call.1} parent=5 // pred_check_branch
        %157 = sbr.rel (%p155) target = $region24
      $region23: #{tpu_custom_call.1} parent=5 // pred_region
        // Predicated region
        $region25: #{tpu_custom_call.1} parent=23 // pred_check
          %p158 = pneg %p33
        $region26: #{tpu_custom_call.1} parent=23 // pred_check_branch
          %160 = sbr.rel (%p158) target = $region28
        $region27: #{tpu_custom_call.1} parent=23 // pred_region
          %p161 = scmp.lt.s32.totalorder %s13, 1
          %s162 = scalar_select %p161, %s13, 1
          %s163 = smul.addr %s162, 8
          %s164 = scalar_lea.vmem %s0, %s163
        $region28: #{tpu_custom_call.1} parent=23 // pred_fallthru
          _
        // Predicated region
        $region29: #{tpu_custom_call.1} parent=23 // pred_check
          %p165 = pneg %p59
        $region30: #{tpu_custom_call.1} parent=23 // pred_check_branch
          %167 = sbr.rel (%p165) target = $region32
        $region31: #{tpu_custom_call.1} parent=23 // pred_region
          %p168 = scmp.lt.s32.totalorder %s13, 1
          %s169 = scalar_select %p168, %s13, 1
          %s170 = smul.addr %s169, 8
          %s171 = scalar_lea.vmem %s1, %s170
        $region32: #{tpu_custom_call.1} parent=23 // pred_fallthru
          _
      $region24: #{tpu_custom_call.1} parent=5 // pred_fallthru
        _
      %p172 = scmp.le.s32.totalorder 1, %s13
      %p173 = scmp.lt.s32.totalorder %s13, 3
      %p174 = pnand %p172, %p173
      %p175 = pneg %p174
      // Predicated region
      $region33: #{tpu_custom_call.1} parent=5 // pred_check
        _
      $region34: #{tpu_custom_call.1} parent=5 // pred_check_branch
        %177 = sbr.rel (%p174) target = $region36
      $region35: #{tpu_custom_call.1} parent=5 // pred_region
        %s178 = ssub.s32 %s13, 1
        %p179 = scmp.lt.s32.totalorder %s18, 1
        %s180 = scalar_select %p179, %s18, 1
        %s181 = smul.addr %s180, 8
        %s182 = scalar_lea.vmem %s0, %s181
        %p183 = pneg %p39
        %p184 = pneg %p36
        %p185 = scmp.lt.s32.totalorder %s18, 1
        %s186 = scalar_select %p185, %s18, 1
        %s187 = smul.addr %s186, 8
        %s188 = scalar_lea.vmem %s1, %s187
        %p189 = pneg %p65
        %p190 = pneg %p62
        %p191 = pneg %p86
        %p192 = pneg %p83
        %p193 = pneg %p107
        %p194 = pneg %p104
        %p195 = pneg %p133
        %p196 = pneg %p130
        %s197 = sand.u32 %s120, 1
        %s198 = scalar_lea.sflag [#allocation3], %s197
        %s199 = sand.u32 %s120, 1
        %s200 = smul.addr %s199, 8
        %s201 = scalar_lea.vmem [#allocation2], %s200
        %p202 = scmp.lt.s32.totalorder %s18, 1
        %s203 = scalar_select %p202, %s18, 1
        %s204 = smul.addr %s203, 8
        %s205 = scalar_lea.vmem %s0, %s204
        %p206 = scmp.lt.s32.totalorder %s18, 1
        %s207 = scalar_select %p206, %s18, 1
        %s208 = smul.addr %s207, 8
        %s209 = scalar_lea.vmem %s1, %s208
        %v211 = vld [vmem:[%s2] sm:$0xf]
        %v212 = vld [vmem:[%s2 + $0x4] sm:$0xf]
        %v213 = vld [vmem:[%s2 + $0x8] sm:$0xf]
        %v214 = vld [vmem:[%s2 + $0xc] sm:$0xf]
        %v215 = vld [vmem:[%s2 + $0x10] sm:$0xf]
        %v216 = vld [vmem:[%s2 + $0x14] sm:$0xf]
        %v217 = vld [vmem:[%s2 + $0x18] sm:$0xf]
        %v218 = vld [vmem:[%s2 + $0x1c] sm:$0xf]
        %v219 = vld [vmem:[%s205] sm:$0xff]
        %v220 = vpack.c.bf16 %v219, %v219
        %v221 = vld [vmem:[%s209] sm:$0xff]
        %v222 = vpack.c.bf16 %v221, %v221
        %v227 = vunpack.c.l.b16 %v211
        %v228 = vunpack.c.l.b16 %v212
        %v229 = vunpack.c.l.b16 %v213
        %v230 = vunpack.c.l.b16 %v214
        %v231 = vpack.c.b16 %v228, %v227
        %v232 = vpack.c.b16 %v230, %v229
        %vm235 = vcmask 261120
        %v237 = vsel %vm235, %v222, 0
        %239 = vmatprep.subr.bf16.mxu0 0
        %240 = vmatpush1.bf16.msra.mxu0 0
        %241 = vmatprep.subr.bf16.mxu0 0
        %242 = vmatpush1.bf16.msra.mxu0 0
        %243 = vmatprep.subr.bf16.mxu0 0
        %244 = vmatpush1.bf16.msra.mxu0 0
        %245 = vmatprep.subr.bf16.mxu0 0
        %246 = vmatpush1.bf16.msra.mxu0 0
        %247 = vmatprep.subr.bf16.mxu0 0
        %248 = vmatpush1.bf16.msra.mxu0 0
        %249 = vmatprep.subr.bf16.mxu0 0
        %250 = vmatpush1.bf16.msra.mxu0 0
        %251 = vmatprep.subr.bf16.mxu0 0
        %252 = vmatpush1.bf16.msra.mxu0 %v232
        %253 = vmatprep.subr.bf16.mxu0 0
        %254 = vmatpush1.bf16.msra.mxu0 %v231
        %255 = vmatprep.subr.bf16.mxu0 0
        %256 = vmatpush2.bf16.msra.mxu0 0
        %257 = vmatprep.subr.bf16.mxu0 0
        %258 = vmatpush2.bf16.msra.mxu0 0
        %259 = vmatprep.subr.bf16.mxu0 0
        %260 = vmatpush2.bf16.msra.mxu0 0
        %261 = vmatprep.subr.bf16.mxu0 0
        %262 = vmatpush2.bf16.msra.mxu0 0
        %263 = vmatprep.subr.bf16.mxu0 0
        %264 = vmatpush2.bf16.msra.mxu0 0
        %265 = vmatprep.subr.bf16.mxu0 0
        %266 = vmatpush2.bf16.msra.mxu0 0
        %267 = vmatprep.subr.bf16.mxu0 0
        %268 = vmatpush2.bf16.msra.mxu0 0
        %269 = vmatprep.subr.bf16.mxu0 0
        %270 = vmatpush2.bf16.msra.mxu0 0
        %271 = vmatprep.mubr.bf16.mxu0 0
        %272 = vmatmul.mubr.bf16.gmra.mxu0 %v237
        %v273 = vpop.f32.mrf.mxu0
        %v274 = vadd.f32 0.0, %v273
        %v275 = vpop.f32.mrf.mxu0
        %v276 = vpop.f32.mrf.mxu0
        %v277 = vpop.f32.mrf.mxu0
        %278 = vdwg.mxu0
        %v283 = vunpack.c.l.b16 %v215
        %v284 = vunpack.c.l.b16 %v216
        %v285 = vunpack.c.l.b16 %v217
        %v286 = vunpack.c.l.b16 %v218
        %v287 = vpack.c.b16 %v284, %v283
        %v288 = vpack.c.b16 %v286, %v285
        %v292 = vsel %vm235, %v220, 0
        %294 = vmatprep.subr.bf16.mxu0 0
        %295 = vmatpush1.bf16.msra.mxu0 0
        %296 = vmatprep.subr.bf16.mxu0 0
        %297 = vmatpush1.bf16.msra.mxu0 0
        %298 = vmatprep.subr.bf16.mxu0 0
        %299 = vmatpush1.bf16.msra.mxu0 0
        %300 = vmatprep.subr.bf16.mxu0 0
        %301 = vmatpush1.bf16.msra.mxu0 0
        %302 = vmatprep.subr.bf16.mxu0 0
        %303 = vmatpush1.bf16.msra.mxu0 0
        %304 = vmatprep.subr.bf16.mxu0 0
        %305 = vmatpush1.bf16.msra.mxu0 0
        %306 = vmatprep.subr.bf16.mxu0 0
        %307 = vmatpush1.bf16.msra.mxu0 %v288
        %308 = vmatprep.subr.bf16.mxu0 0
        %309 = vmatpush1.bf16.msra.mxu0 %v287
        %310 = vmatprep.subr.bf16.mxu0 0
        %311 = vmatpush2.bf16.msra.mxu0 0
        %312 = vmatprep.subr.bf16.mxu0 0
        %313 = vmatpush2.bf16.msra.mxu0 0
        %314 = vmatprep.subr.bf16.mxu0 0
        %315 = vmatpush2.bf16.msra.mxu0 0
        %316 = vmatprep.subr.bf16.mxu0 0
        %317 = vmatpush2.bf16.msra.mxu0 0
        %318 = vmatprep.subr.bf16.mxu0 0
        %319 = vmatpush2.bf16.msra.mxu0 0
        %320 = vmatprep.subr.bf16.mxu0 0
        %321 = vmatpush2.bf16.msra.mxu0 0
        %322 = vmatprep.subr.bf16.mxu0 0
        %323 = vmatpush2.bf16.msra.mxu0 0
        %324 = vmatprep.subr.bf16.mxu0 0
        %325 = vmatpush2.bf16.msra.mxu0 0
        %326 = vmatprep.mubr.bf16.mxu0 0
        %327 = vmatmul.mubr.bf16.gmra.mxu0 %v292
        %v328 = vpop.f32.mrf.mxu0
        %v329 = vadd.f32 %v274, %v328
        %v330 = vpop.f32.mrf.mxu0
        %v331 = vpop.f32.mrf.mxu0
        %v332 = vpop.f32.mrf.mxu0
        %333 = vdwg.mxu0
        %v334 = vld [vmem:[%s3] sm:$0x1]
        %v336 = vlaneseq
        %v337 = vshrl.u32 %v336, 7
        %v338 = vsub.s32 0, %v337
        %v339 = vrot.slane %v334, %v338
        %v341 = vadd.f32 %v329, %v339
        %v342 = vtanh.pop %v341
        %343 = vst.msk [vmem:[%s201] sm:$0xff] %vm235, %v342
        %s344 = sand.u32 %s120, 1
        %s345 = scalar_lea.sflag [#allocation3], %s344
        %s346 = sand.u32 %s120, 1
        %s347 = smul.addr %s346, 8
        %s348 = scalar_lea.vmem [#allocation2], %s347
        // Predicated region
        $region37: #{tpu_custom_call.1} parent=35 // pred_check
          %p349 = pneg %p130
        $region38: #{tpu_custom_call.1} parent=35 // pred_check_branch
          %351 = sbr.rel (%p349) target = $region40
        $region39: #{tpu_custom_call.1} parent=35 // pred_region
          %s353 = ssub.s32 128, 128
          %354 = vsyncadd %s345, %s353
          %s355 = smul.addr %s18, 128
          %s356 = scalar_lea.hbm %s4, %s355
          %s358 = sshll.u32 %s348, 4
          %s359 = int_to_ptr.vmem [resolvable:$true] %s358
          %361 = dma.vmem_to_hbm [thread:$0]  %s359, 128, %s356, %s345
        $region40: #{tpu_custom_call.1} parent=35 // pred_fallthru
          _
      $region36: #{tpu_custom_call.1} parent=5 // pred_fallthru
        _
      %p362 = scmp.le.s32.totalorder 2, %s13
      // Predicated region
      $region41: #{tpu_custom_call.1} parent=5 // pred_check
        %p363 = pneg %p362
      $region42: #{tpu_custom_call.1} parent=5 // pred_check_branch
        %365 = sbr.rel (%p363) target = $region44
      $region43: #{tpu_custom_call.1} parent=5 // pred_region
        %s366 = ssub.s32 %s13, 2
        // Predicated region
        $region45: #{tpu_custom_call.1} parent=43 // pred_check
          %p367 = pneg %p136
        $region46: #{tpu_custom_call.1} parent=43 // pred_check_branch
          %369 = sbr.rel (%p367) target = $region48
        $region47: #{tpu_custom_call.1} parent=43 // pred_region
          %s370 = sand.u32 %s121, 1
          %s371 = scalar_lea.sflag [#allocation3], %s370
          %s372 = sand.u32 %s121, 1
          %s373 = smul.addr %s372, 8
          %s374 = scalar_lea.vmem [#allocation2], %s373
          %375 = dma.done %s371, 128
        $region48: #{tpu_custom_call.1} parent=43 // pred_fallthru
          _
      $region44: #{tpu_custom_call.1} parent=5 // pred_fallthru
        _
    $region6: #{tpu_custom_call.1} parent=1 // loop_footer
      %s17 = sadd.s32 1, %s13
    $region7: #{tpu_custom_call.1} parent=1 // loop_footer_branch
      %12 = sbr.rel target = $region3
    $region8: #{tpu_custom_call.1} parent=1 // loop_exit
      _
    %376 = vsyncpa [#allocation3], 1
    %s377 = scalar_lea.sflag [#allocation3], 1
    %378 = vsyncpa %s377, 1

</llo_original>
